<compile_context>
chip_gen: v6e
topology: v6e:2x2x1
jax: 0.10.0
libtpu: 0.0.40
codegen_flags: <defaults>
</compile_context>

<pallas_src>
import functools
import math

import jax
import jax.numpy as jnp
from jax import lax
from jax.experimental import pallas as pl
from jax.experimental.pallas import tpu as pltpu


_MIN_SPLIT_BYTES = 1 << 20     # do not shred tensors below ~1 MiB into tiles
_MIN_GRID_STEPS = 8            # target grid steps for megacore + pipelining


def _cdiv(a, b):
    return -(-a // b)


def _round_up(v, m):
    return _cdiv(v, m) * m


def _padded_block_bytes(shape, itemsize):
    """VMEM footprint of one block, accounting for (8, 128) minor-dim tiling."""
    if len(shape) == 1:
        return _round_up(shape[0], 128) * 8 * itemsize
    lead = math.prod(shape[:-2]) if len(shape) > 2 else 1
    return lead * _round_up(shape[-2], 8) * _round_up(shape[-1], 128) * itemsize


@functools.lru_cache(maxsize=None)
def _hw_params():
    """(per-step block budget, vmem_limit cap) derived from the TPU generation."""
    vmem_bytes = 64 << 20                       # conservative default (v7x core)
    try:
        info = pltpu.get_tpu_info()
        v = getattr(info, "vmem_capacity_bytes", None)
        if v:
            vmem_bytes = int(v)
    except Exception:                           # pragma: no cover - safe fallback
        pass
    if vmem_bytes >= (96 << 20):                # v5e / v6e: 128 MiB VMEM
        block_budget = 12 << 20
    else:                                       # v7x: 64 MiB VMEM per core
        block_budget = 6 << 20
    vmem_cap = max(vmem_bytes - (8 << 20), 24 << 20)   # leave compiler headroom
    return block_budget, vmem_cap


def _vmem_limit_bytes(per_step_bytes, vmem_cap):
    # Double-buffered in+out blocks plus slack, never the whole physical VMEM.
    need = 2 * per_step_bytes + (4 << 20)
    lo = min(32 << 20, vmem_cap)
    return int(min(max(need, lo), vmem_cap))


def _target_steps(total_bytes):
    # Only ask for many grid steps when the tensor is big enough that each
    # step still moves a large block.
    return min(_MIN_GRID_STEPS, max(1, total_bytes // _MIN_SPLIT_BYTES))


# ---------------------------------------------------------------------------
# Kernels
# ---------------------------------------------------------------------------

def _copy_kernel(x_ref, o_ref):
    o_ref[...] = x_ref[...]


def _swap_groups_kernel(x_ref, o_ref):
    """x_ref: (nb, tg1, tg2) -> o_ref: (nb, tg2, tg1).

    nb == 1 (large blocks, the common case) is a single full-width XLU
    transpose; small nb is statically unrolled so vxpose pushes issue
    back-to-back with no per-element loop/branch bundles; large nb uses an
    unrolled fori_loop.
    """
    nb = x_ref.shape[0]
    if nb == 1:
        o_ref[0] = x_ref[0].T
    elif nb <= 16:
        for i in range(nb):              # static unroll
            o_ref[i] = x_ref[i].T
    else:
        def body(i, carry):
            o_ref[i] = x_ref[i].T
            return carry
        lax.fori_loop(0, nb, body, 0, unroll=8)


# ---------------------------------------------------------------------------
# Leading-dim permutes (untouched suffix): pure DMA remapping
# ---------------------------------------------------------------------------

def _leading_permute(x, dims, s, budget, vmem_cap):
    """Permutation fixing the last `s >= 1` dims: pure DMA block remapping.

    The untouched suffix is collapsed into a lane-dense tail (free row-major
    reshape outside the kernel); the last moved output dim carries a block
    extent so each grid step copies a large slab; the permutation itself lives
    entirely in the BlockSpec index_maps (no in-kernel compute).
    """
    ndim = x.ndim
    k = ndim - s
    p = dims[:k]                           # permutation of range(k)
    pinv = [0] * k
    for j, d in enumerate(p):
        pinv[d] = j
    tail = tuple(x.shape[k:])
    T = math.prod(tail)
    itemsize = x.dtype.itemsize
    out_shape = tuple(x.shape[d] for d in dims)

    # Lane-dense collapsed suffix (free reshape; minor block dims stay full).
    if T % 128 == 0 and T >= 128:
        new_tail = (T // 128, 128)
    elif s >= 2:
        new_tail = (math.prod(tail[:-1]), tail[-1])
    else:
        new_tail = tail
    st = len(new_tail)
    x2 = x.reshape(x.shape[:k] + new_tail)
    out2_shape = tuple(x.shape[d] for d in p) + new_tail
    lead_sizes = [x.shape[d] for d in p]

    if st >= 2:
        d_star = p[-1]                     # input dim sitting last among moved dims
        s_star = x.shape[d_star]
        tail_bytes = _padded_block_bytes(new_tail, itemsize)
        bq = max(1, min(s_star, budget // max(2 * tail_bytes, 1)))
        nsteps_other = math.prod(lead_sizes[:-1])
        target = min(_target_steps(x.size * itemsize), nsteps_other * s_star)
        while nsteps_other * _cdiv(s_star, bq) < target and bq > 1:
            bq = max(1, bq // 2)
        grid = tuple(lead_sizes[:-1]) + (_cdiv(s_star, bq),)
        out_block = (pl.Squeezed(),) * (k - 1) + (bq,) + new_tail
        in_block = tuple(bq if d == d_star else pl.Squeezed()
                         for d in range(k)) + new_tail
        per_step = 2 * _padded_block_bytes((bq,) + new_tail, itemsize)
    else:
        # TODO(synk): cold path (s == 1 with a short, non-128 last dim); only
        # reachable via the generic decomposition, never by the module's own
        # channel-first/last permutes.  Per-element (D,) row copies.
        grid = tuple(lead_sizes)
        out_block = (pl.Squeezed(),) * k + new_tail
        in_block = (pl.Squeezed(),) * k + new_tail
        per_step = 2 * _padded_block_bytes(new_tail, itemsize)

    zeros = (0,) * st

    def in_map(*g):
        return tuple(g[pinv[d]] for d in range(k)) + zeros

    def out_map(*g):
        return tuple(g) + zeros

    out2 = pl.pallas_call(
        _copy_kernel,
        out_shape=jax.ShapeDtypeStruct(out2_shape, x.dtype),
        grid=grid,
        in_specs=[pl.BlockSpec(in_block, in_map)],
        out_specs=pl.BlockSpec(out_block, out_map),
        compiler_params=pltpu.CompilerParams(
            dimension_semantics=("parallel",) * len(grid),
            vmem_limit_bytes=_vmem_limit_bytes(per_step, vmem_cap)),
    )(x2)
    return out2.reshape(out_shape)


# ---------------------------------------------------------------------------
# Group rotations (move the last dim): one 2-D transpose per block
# ---------------------------------------------------------------------------

def _choose_group_tiles(B, G1, G2, itemsize, budget, total_bytes):
    """Pick (nb, tg1, tg2) for the group-swap kernel.

    Tiles are full-extent or multiples of 128 (lane-dense, tiling-compliant)
    with cdiv grids, sized up to `budget` combined in+out bytes per batch
    element, then batch-folded; finally capped so large tensors keep a few
    grid steps for megacore sharding and DMA/compute overlap.
    """
    def per_elem(tg1, tg2):
        return (_padded_block_bytes((tg1, tg2), itemsize)
                + _padded_block_bytes((tg2, tg1), itemsize))

    tg1, tg2 = G1, G2
    if per_elem(tg1, tg2) > budget and G2 > 128:
        c = max(1, min(G2 // 128, budget // max(per_elem(G1, 128), 1)))
        tg2 = 128 * c
    if per_elem(tg1, tg2) > budget and G1 > 128:
        c = max(1, min(G1 // 128, budget // max(per_elem(128, tg2), 1)))
        tg1 = 128 * c

    nb = max(1, min(B, budget // max(per_elem(tg1, tg2), 1)))

    target = _target_steps(total_bytes)

    def steps():
        return _cdiv(B, nb) * _cdiv(G1, tg1) * _cdiv(G2, tg2)

    while steps() < target and nb > 1:
        nb = max(1, nb // 2)
    while steps() < target and tg2 > 128:
        tg2 = max(128, _round_up(tg2 // 2, 128))
    while steps() < target and tg1 > 128:
        tg1 = max(128, _round_up(tg1 // 2, 128))
    return nb, tg1, tg2


def _inner_permute(x, dims, out_shape, budget, vmem_cap):
    """Permutations that move the last dim."""
    ndim = x.ndim
    b = 0
    while b < ndim and dims[b] == b:
        b += 1
    q = tuple(d - b for d in dims[b:])         # inner permutation, q[0] != 0
    S = tuple(x.shape[b:])
    m = len(q)
    B = math.prod(x.shape[:b])
    itemsize = x.dtype.itemsize
    total_bytes = x.size * itemsize

    # Group rotation: q == (kk..m-1, 0..kk-1)  (NCHW<->NHWC, (0,2,1), 2-D .T).
    kk = None
    for cand in range(1, m):
        if q == tuple(range(cand, m)) + tuple(range(cand)):
            kk = cand
            break

    if kk is not None:
        G1 = math.prod(S[:kk])
        G2 = math.prod(S[kk:])
        x_flat = x.reshape(B, G1, G2)                     # free row-major reshape
        nb, tg1, tg2 = _choose_group_tiles(B, G1, G2, itemsize, budget,
                                           total_bytes)
        per_step = nb * (_padded_block_bytes((tg1, tg2), itemsize)
                         + _padded_block_bytes((tg2, tg1), itemsize))
        out3 = pl.pallas_call(
            _swap_groups_kernel,
            out_shape=jax.ShapeDtypeStruct((B, G2, G1), x.dtype),
            grid=(_cdiv(B, nb), _cdiv(G1, tg1), _cdiv(G2, tg2)),
            in_specs=[pl.BlockSpec((nb, tg1, tg2),
                                   lambda bi, ii, ji: (bi, ii, ji))],
            out_specs=pl.BlockSpec((nb, tg2, tg1),
                                   lambda bi, ii, ji: (bi, ji, ii)),
            compiler_params=pltpu.CompilerParams(
                dimension_semantics=("parallel", "parallel", "parallel"),
                vmem_limit_bytes=_vmem_limit_bytes(per_step, vmem_cap)),
        )(x_flat)
        return out3.reshape(out_shape)                    # free row-major reshape

    # Anything else: decompose into [leading permute] o [group rotation] so
    # every pallas_call is either pure DMA or a single 2-D transpose per block.
    j = dims.index(ndim - 1)        # output position of the input's last dim
    kk2 = ndim - 1 - j              # > 0 because dims[-1] != ndim-1 here
    d2 = tuple(range(kk2, ndim)) + tuple(range(kk2))
    d2inv = [0] * ndim
    for t, d in enumerate(d2):
        d2inv[d] = t
    d1 = tuple(dims[d2inv[t]] for t in range(ndim))       # fixes the last dim
    y = permute_pallas(x, d1)
    return permute_pallas(y, d2)


# ---------------------------------------------------------------------------
# Public wrapper
# ---------------------------------------------------------------------------

def permute_pallas(x, dims):
    """torch.Tensor.permute(dims) for a jax.Array, computed in Pallas kernels."""
    ndim = x.ndim
    dims = tuple(int(d) % ndim for d in dims) if ndim else tuple(dims)
    assert len(dims) == ndim and sorted(dims) == list(range(ndim)), dims

    if dims == tuple(range(ndim)):
        return x                                  # identity (torch returns a view)
    out_shape = tuple(x.shape[d] for d in dims)
    if any(d == 0 for d in x.shape):
        return jnp.zeros(out_shape, x.dtype)      # degenerate empty tensor

    budget, vmem_cap = _hw_params()

    s = 0                                         # longest untouched suffix
    while s < ndim and dims[ndim - 1 - s] == ndim - 1 - s:
        s += 1
    if s >= 1:
        return _leading_permute(x, dims, s, budget, vmem_cap)
    return _inner_permute(x, dims, out_shape, budget, vmem_cap)


class Permute:
    """Pallas/JAX equivalent of the PyTorch `Permute` nn.Module."""

    def __init__(self, dims):
        self.dims = dims

    def __call__(self, inputs):
        if isinstance(inputs, jax.Array):
            return permute_pallas(inputs, self.dims)
        return [permute_pallas(x, d) for x, d in zip(inputs, self.dims)]


if __name__ == "__main__":
    key = jax.random.PRNGKey(0)
    k1, k2 = jax.random.split(key)

    # NCHW activation, as produced by the surrounding interpcnn2 convolutions.
    x = jax.random.normal(k1, (2, 4, 16, 16), dtype=jnp.float32)
    x2 = jax.random.normal(k2, (2, 8, 32), dtype=jnp.float32)

    # Hot path: NCHW -> NHWC (group rotation, kk=1).
    perm = Permute((0, 2, 3, 1))
    y = jax.block_until_ready(perm(x))
    assert y.shape == (2, 16, 16, 4)
    assert jnp.allclose(y, jnp.transpose(x, (0, 2, 3, 1)))

    # Reverse direction: NHWC -> NCHW (group rotation, kk=2); round-trips to x.
    z = jax.block_until_ready(permute_pallas(y, (0, 3, 1, 2)))
    assert z.shape == x.shape
    assert jnp.allclose(z, x)

    # Leading-only permutation: pure BlockSpec/DMA remapping with a lane-dense
    # collapsed (T//128, 128) suffix.
    w = jax.block_until_ready(permute_pallas(x, (1, 0, 2, 3)))
    assert w.shape == (4, 2, 16, 16)
    assert jnp.allclose(w, jnp.transpose(x, (1, 0, 2, 3)))

    # List-of-tensors case (one dims tuple per tensor), as in the module.
    perm_list = Permute([(0, 2, 3, 1), (0, 2, 1)])
    ys = jax.block_until_ready(perm_list([x, x2]))
    assert ys[0].shape == (2, 16, 16, 4)
    assert ys[1].shape == (2, 32, 8)
    assert jnp.allclose(ys[0], jnp.transpose(x, (0, 2, 3, 1)))
    assert jnp.allclose(ys[1], jnp.transpose(x2, (0, 2, 1)))

    print("KERNEL_OK")
</pallas_src>

<mosaic_0001>
module attributes {stable_mosaic.version = 11 : i64} {
  func.func @_swap_groups_kernel(%arg0: i32, %arg1: i32, %arg2: i32, %arg3: memref<2x4x256xf32, #tpu.memory_space<vmem>>, %arg4: memref<2x256x4xf32, #tpu.memory_space<vmem>>) attributes {dimension_semantics = [#tpu.dimension_semantics<parallel>, #tpu.dimension_semantics<parallel>, #tpu.dimension_semantics<parallel>], iteration_bounds = array<i64: 1, 1, 1>, scalar_prefetch = 0 : i64, scratch_operands = 0 : i64, tpu.core_type = #tpu.core_type<tc>, window_params = [{transform_indices = @transform_0, window_bounds = array<i64: 2, 4, 256>}, {transform_indices = @transform_1, window_bounds = array<i64: 2, 256, 4>}]} {
    %c0 = arith.constant 0 : index
    %c0_0 = arith.constant 0 : index
    %c0_1 = arith.constant 0 : index
    %0 = vector.load %arg3[%c0, %c0_0, %c0_1] : memref<2x4x256xf32, #tpu.memory_space<vmem>>, vector<1x4x256xf32>
    %1 = vector.shape_cast %0 : vector<1x4x256xf32> to vector<4x256xf32>
    %2 = tpu.transpose %1, [1, 0] : vector<4x256xf32> -> vector<256x4xf32>
    %c0_2 = arith.constant 0 : index
    %c0_3 = arith.constant 0 : index
    %c0_4 = arith.constant 0 : index
    %3 = vector.load %arg4[%c0_2, %c0_3, %c0_4] : memref<2x256x4xf32, #tpu.memory_space<vmem>>, vector<1x256x4xf32>
    %4 = vector.shape_cast %3 : vector<1x256x4xf32> to vector<256x4xf32>
    %5 = vector.shape_cast %2 : vector<256x4xf32> to vector<1x256x4xf32>
    tpu.vector_store %arg4[%c0_2, %c0_3, %c0_4], %5 {strides = array<i32>} : memref<2x256x4xf32, #tpu.memory_space<vmem>>, vector<1x256x4xf32>,
    %c1 = arith.constant 1 : index
    %c0_5 = arith.constant 0 : index
    %c0_6 = arith.constant 0 : index
    %6 = vector.load %arg3[%c1, %c0_5, %c0_6] : memref<2x4x256xf32, #tpu.memory_space<vmem>>, vector<1x4x256xf32>
    %7 = vector.shape_cast %6 : vector<1x4x256xf32> to vector<4x256xf32>
    %8 = tpu.transpose %7, [1, 0] : vector<4x256xf32> -> vector<256x4xf32>
    %c1_7 = arith.constant 1 : index
    %c0_8 = arith.constant 0 : index
    %c0_9 = arith.constant 0 : index
    %9 = vector.load %arg4[%c1_7, %c0_8, %c0_9] : memref<2x256x4xf32, #tpu.memory_space<vmem>>, vector<1x256x4xf32>
    %10 = vector.shape_cast %9 : vector<1x256x4xf32> to vector<256x4xf32>
    %11 = vector.shape_cast %8 : vector<256x4xf32> to vector<1x256x4xf32>
    tpu.vector_store %arg4[%c1_7, %c0_8, %c0_9], %11 {strides = array<i32>} : memref<2x256x4xf32, #tpu.memory_space<vmem>>, vector<1x256x4xf32>,
    return
  }
  func.func @transform_0(%arg0: i32, %arg1: i32, %arg2: i32) -> (i32, i32, i32) {
    %c0_i32 = arith.constant 0 : i32
    return %arg0, %arg1, %arg2 : i32, i32, i32
  }
  func.func @transform_1(%arg0: i32, %arg1: i32, %arg2: i32) -> (i32, i32, i32) {
    %c0_i32 = arith.constant 0 : i32
    return %arg0, %arg2, %arg1 : i32, i32, i32
  }
}

</mosaic_0001>

<llo_original>
// kernel: tpu_custom_call.1
$region0: #{tpu_custom_call.1}
  #allocation0 [shape = 'u32[]', space=smem, size = 0x4, offset = 0x4, fixed_abs, tag = 'smem constant byte address 0x4 - core index']
  #allocation1 [shape = 'u32[144,128]{1,0:T(1,128)}', space=vmem, size = 0x12000, scoped, tag = 'internal scratch']
  %s0 = inlined_call_operand.hbm [shape: f32[2,4,256], index: 0, kind: input, shape index: {}]
  %s1 = inlined_call_operand.vmem [shape: f32[2,256,4], index: 1, kind: output, shape index: {}]
  %s2 = sld [smem:[#allocation0]]
  $region18: #{tpu_custom_call.1} parent=0
    _
  %s4 = ssub.s32 1, %s2
  %s5 = scalar_select 0, %s4, %s2
  $region1: #{tpu_custom_call.1} parent=0
    #allocation2 [shape = 'u8[8192]{0}', space=vmem, size = 0x2000, scoped, tag = 'input window, operand 0, single buffered']
    #allocation3 [shape = 's32[1]{0}', space=sflag, size = 0x4, scoped, tag = 'scoped memory for tpu_custom_call.1']
    %6 = vsyncpa [#allocation3], 0
    // Predicated region
    $region2: #{tpu_custom_call.1} parent=1 // pred_check
      _
    $region3: #{tpu_custom_call.1} parent=1 // pred_check_branch
      %8 = sbr.rel (0) target = $region5
    $region4: #{tpu_custom_call.1} parent=1 // pred_region
      %s10 = ssub.s32 256, 256
      %11 = vsyncadd [#allocation3], %s10
      %s12 = sshll.u32 [#allocation2], 4
      %s13 = int_to_ptr.vmem [resolvable:$true] %s12
      %18 = dma.hbm_to_vmem [thread:$0]  %s0, 256, %s13, [#allocation3], 128, 128, 8
    $region5: #{tpu_custom_call.1} parent=1 // pred_fallthru
      _
    // Predicated region
    $region6: #{tpu_custom_call.1} parent=1 // pred_check
      _
    $region7: #{tpu_custom_call.1} parent=1 // pred_check_branch
      %20 = sbr.rel (0) target = $region9
    $region8: #{tpu_custom_call.1} parent=1 // pred_region
      %21 = dma.done [#allocation3], 256
    $region9: #{tpu_custom_call.1} parent=1 // pred_fallthru
      _
    %v22 = vld [vmem:[#allocation2] sm:$0xff]
    %v24 = vcombine.high %v22, %v22
    %26 = vxpose.xlu0.b32.start [1/16] %v22, 128
    %27 = vxpose.xlu0.b32.cont [2/16] 0.0, 128
    %28 = vxpose.xlu0.b32.cont [3/16] 0.0, 128
    %29 = vxpose.xlu0.b32.cont [4/16] 0.0, 128
    %30 = vxpose.xlu0.b32.cont [5/16] 0.0, 128
    %31 = vxpose.xlu0.b32.cont [6/16] 0.0, 128
    %32 = vxpose.xlu0.b32.cont [7/16] 0.0, 128
    %33 = vxpose.xlu0.b32.cont [8/16] 0.0, 128
    %34 = vxpose.xlu0.b32.cont [9/16] 0.0, 128
    %35 = vxpose.xlu0.b32.cont [10/16] 0.0, 128
    %36 = vxpose.xlu0.b32.cont [11/16] 0.0, 128
    %37 = vxpose.xlu0.b32.cont [12/16] 0.0, 128
    %38 = vxpose.xlu0.b32.cont [13/16] 0.0, 128
    %39 = vxpose.xlu0.b32.cont [14/16] 0.0, 128
    %40 = vxpose.xlu0.b32.cont [15/16] 0.0, 128
    %41 = vxpose.xlu0.b32.end [16/16] 0.0, 128
    %v42 = vpop.trf.xlu0
    %v43 = vpop.trf.xlu0
    %v44 = vpop.trf.xlu0
    %v45 = vpop.trf.xlu0
    %v46 = vpop.trf.xlu0
    %v47 = vpop.trf.xlu0
    %v48 = vpop.trf.xlu0
    %v49 = vpop.trf.xlu0
    %v50 = vpop.trf.xlu0
    %v51 = vpop.trf.xlu0
    %v52 = vpop.trf.xlu0
    %v53 = vpop.trf.xlu0
    %v54 = vpop.trf.xlu0
    %v55 = vpop.trf.xlu0
    %v56 = vpop.trf.xlu0
    %v57 = vpop.trf.xlu0
    %58 = vxpose.xlu0.b32.start [1/16] %v24, 128
    %59 = vxpose.xlu0.b32.cont [2/16] 0.0, 128
    %60 = vxpose.xlu0.b32.cont [3/16] 0.0, 128
    %61 = vxpose.xlu0.b32.cont [4/16] 0.0, 128
    %62 = vxpose.xlu0.b32.cont [5/16] 0.0, 128
    %63 = vxpose.xlu0.b32.cont [6/16] 0.0, 128
    %64 = vxpose.xlu0.b32.cont [7/16] 0.0, 128
    %65 = vxpose.xlu0.b32.cont [8/16] 0.0, 128
    %66 = vxpose.xlu0.b32.cont [9/16] 0.0, 128
    %67 = vxpose.xlu0.b32.cont [10/16] 0.0, 128
    %68 = vxpose.xlu0.b32.cont [11/16] 0.0, 128
    %69 = vxpose.xlu0.b32.cont [12/16] 0.0, 128
    %70 = vxpose.xlu0.b32.cont [13/16] 0.0, 128
    %71 = vxpose.xlu0.b32.cont [14/16] 0.0, 128
    %72 = vxpose.xlu0.b32.cont [15/16] 0.0, 128
    %73 = vxpose.xlu0.b32.end [16/16] 0.0, 128
    %v74 = vpop.trf.xlu0
    %v75 = vpop.trf.xlu0
    %v76 = vpop.trf.xlu0
    %v77 = vpop.trf.xlu0
    %v78 = vpop.trf.xlu0
    %v79 = vpop.trf.xlu0
    %v80 = vpop.trf.xlu0
    %v81 = vpop.trf.xlu0
    %v82 = vpop.trf.xlu0
    %v83 = vpop.trf.xlu0
    %v84 = vpop.trf.xlu0
    %v85 = vpop.trf.xlu0
    %v86 = vpop.trf.xlu0
    %v87 = vpop.trf.xlu0
    %v88 = vpop.trf.xlu0
    %v89 = vpop.trf.xlu0
    %vm90 = vcmask 31744
    %91 = vst.msk [vmem:[%s1] sm:$0xff] %vm90, %v42
    %92 = vst.msk [vmem:[%s1 + $0x8] sm:$0xff] %vm90, %v43
    %93 = vst.msk [vmem:[%s1 + $0x10] sm:$0xff] %vm90, %v44
    %94 = vst.msk [vmem:[%s1 + $0x18] sm:$0xff] %vm90, %v45
    %95 = vst.msk [vmem:[%s1 + $0x20] sm:$0xff] %vm90, %v46
    %96 = vst.msk [vmem:[%s1 + $0x28] sm:$0xff] %vm90, %v47
    %97 = vst.msk [vmem:[%s1 + $0x30] sm:$0xff] %vm90, %v48
    %98 = vst.msk [vmem:[%s1 + $0x38] sm:$0xff] %vm90, %v49
    %99 = vst.msk [vmem:[%s1 + $0x40] sm:$0xff] %vm90, %v50
    %100 = vst.msk [vmem:[%s1 + $0x48] sm:$0xff] %vm90, %v51
    %101 = vst.msk [vmem:[%s1 + $0x50] sm:$0xff] %vm90, %v52
    %102 = vst.msk [vmem:[%s1 + $0x58] sm:$0xff] %vm90, %v53
    %103 = vst.msk [vmem:[%s1 + $0x60] sm:$0xff] %vm90, %v54
    %104 = vst.msk [vmem:[%s1 + $0x68] sm:$0xff] %vm90, %v55
    %105 = vst.msk [vmem:[%s1 + $0x70] sm:$0xff] %vm90, %v56
    %106 = vst.msk [vmem:[%s1 + $0x78] sm:$0xff] %vm90, %v57
    %107 = vst.msk [vmem:[%s1 + $0x80] sm:$0xff] %vm90, %v74
    %108 = vst.msk [vmem:[%s1 + $0x88] sm:$0xff] %vm90, %v75
    %109 = vst.msk [vmem:[%s1 + $0x90] sm:$0xff] %vm90, %v76
    %110 = vst.msk [vmem:[%s1 + $0x98] sm:$0xff] %vm90, %v77
    %111 = vst.msk [vmem:[%s1 + $0xa0] sm:$0xff] %vm90, %v78
    %112 = vst.msk [vmem:[%s1 + $0xa8] sm:$0xff] %vm90, %v79
    %113 = vst.msk [vmem:[%s1 + $0xb0] sm:$0xff] %vm90, %v80
    %114 = vst.msk [vmem:[%s1 + $0xb8] sm:$0xff] %vm90, %v81
    %115 = vst.msk [vmem:[%s1 + $0xc0] sm:$0xff] %vm90, %v82
    %116 = vst.msk [vmem:[%s1 + $0xc8] sm:$0xff] %vm90, %v83
    %117 = vst.msk [vmem:[%s1 + $0xd0] sm:$0xff] %vm90, %v84
    %118 = vst.msk [vmem:[%s1 + $0xd8] sm:$0xff] %vm90, %v85
    %119 = vst.msk [vmem:[%s1 + $0xe0] sm:$0xff] %vm90, %v86
    %120 = vst.msk [vmem:[%s1 + $0xe8] sm:$0xff] %vm90, %v87
    %121 = vst.msk [vmem:[%s1 + $0xf0] sm:$0xff] %vm90, %v88
    %122 = vst.msk [vmem:[%s1 + $0xf8] sm:$0xff] %vm90, %v89
    %s123 = scalar_lea.vmem [#allocation2], 8
    %v124 = vld [vmem:[%s123] sm:$0xff]
    %v126 = vcombine.high %v124, %v124
    %128 = vxpose.xlu0.b32.start [1/16] %v124, 128
    %129 = vxpose.xlu0.b32.cont [2/16] 0.0, 128
    %130 = vxpose.xlu0.b32.cont [3/16] 0.0, 128
    %131 = vxpose.xlu0.b32.cont [4/16] 0.0, 128
    %132 = vxpose.xlu0.b32.cont [5/16] 0.0, 128
    %133 = vxpose.xlu0.b32.cont [6/16] 0.0, 128
    %134 = vxpose.xlu0.b32.cont [7/16] 0.0, 128
    %135 = vxpose.xlu0.b32.cont [8/16] 0.0, 128
    %136 = vxpose.xlu0.b32.cont [9/16] 0.0, 128
    %137 = vxpose.xlu0.b32.cont [10/16] 0.0, 128
    %138 = vxpose.xlu0.b32.cont [11/16] 0.0, 128
    %139 = vxpose.xlu0.b32.cont [12/16] 0.0, 128
    %140 = vxpose.xlu0.b32.cont [13/16] 0.0, 128
    %141 = vxpose.xlu0.b32.cont [14/16] 0.0, 128
    %142 = vxpose.xlu0.b32.cont [15/16] 0.0, 128
    %143 = vxpose.xlu0.b32.end [16/16] 0.0, 128
    %v144 = vpop.trf.xlu0
    %v145 = vpop.trf.xlu0
    %v146 = vpop.trf.xlu0
    %v147 = vpop.trf.xlu0
    %v148 = vpop.trf.xlu0
    %v149 = vpop.trf.xlu0
    %v150 = vpop.trf.xlu0
    %v151 = vpop.trf.xlu0
    %v152 = vpop.trf.xlu0
    %v153 = vpop.trf.xlu0
    %v154 = vpop.trf.xlu0
    %v155 = vpop.trf.xlu0
    %v156 = vpop.trf.xlu0
    %v157 = vpop.trf.xlu0
    %v158 = vpop.trf.xlu0
    %v159 = vpop.trf.xlu0
    %160 = vxpose.xlu0.b32.start [1/16] %v126, 128
    %161 = vxpose.xlu0.b32.cont [2/16] 0.0, 128
    %162 = vxpose.xlu0.b32.cont [3/16] 0.0, 128
    %163 = vxpose.xlu0.b32.cont [4/16] 0.0, 128
    %164 = vxpose.xlu0.b32.cont [5/16] 0.0, 128
    %165 = vxpose.xlu0.b32.cont [6/16] 0.0, 128
    %166 = vxpose.xlu0.b32.cont [7/16] 0.0, 128
    %167 = vxpose.xlu0.b32.cont [8/16] 0.0, 128
    %168 = vxpose.xlu0.b32.cont [9/16] 0.0, 128
    %169 = vxpose.xlu0.b32.cont [10/16] 0.0, 128
    %170 = vxpose.xlu0.b32.cont [11/16] 0.0, 128
    %171 = vxpose.xlu0.b32.cont [12/16] 0.0, 128
    %172 = vxpose.xlu0.b32.cont [13/16] 0.0, 128
    %173 = vxpose.xlu0.b32.cont [14/16] 0.0, 128
    %174 = vxpose.xlu0.b32.cont [15/16] 0.0, 128
    %175 = vxpose.xlu0.b32.end [16/16] 0.0, 128
    %v176 = vpop.trf.xlu0
    %v177 = vpop.trf.xlu0
    %v178 = vpop.trf.xlu0
    %v179 = vpop.trf.xlu0
    %v180 = vpop.trf.xlu0
    %v181 = vpop.trf.xlu0
    %v182 = vpop.trf.xlu0
    %v183 = vpop.trf.xlu0
    %v184 = vpop.trf.xlu0
    %v185 = vpop.trf.xlu0
    %v186 = vpop.trf.xlu0
    %v187 = vpop.trf.xlu0
    %v188 = vpop.trf.xlu0
    %v189 = vpop.trf.xlu0
    %v190 = vpop.trf.xlu0
    %v191 = vpop.trf.xlu0
    %s192 = scalar_lea.vmem %s1, 256
    %193 = vst.msk [vmem:[%s192] sm:$0xff] %vm90, %v144
    %194 = vst.msk [vmem:[%s192 + $0x8] sm:$0xff] %vm90, %v145
    %195 = vst.msk [vmem:[%s192 + $0x10] sm:$0xff] %vm90, %v146
    %196 = vst.msk [vmem:[%s192 + $0x18] sm:$0xff] %vm90, %v147
    %197 = vst.msk [vmem:[%s192 + $0x20] sm:$0xff] %vm90, %v148
    %198 = vst.msk [vmem:[%s192 + $0x28] sm:$0xff] %vm90, %v149
    %199 = vst.msk [vmem:[%s192 + $0x30] sm:$0xff] %vm90, %v150
    %200 = vst.msk [vmem:[%s192 + $0x38] sm:$0xff] %vm90, %v151
    %201 = vst.msk [vmem:[%s192 + $0x40] sm:$0xff] %vm90, %v152
    %202 = vst.msk [vmem:[%s192 + $0x48] sm:$0xff] %vm90, %v153
    %203 = vst.msk [vmem:[%s192 + $0x50] sm:$0xff] %vm90, %v154
    %204 = vst.msk [vmem:[%s192 + $0x58] sm:$0xff] %vm90, %v155
    %205 = vst.msk [vmem:[%s192 + $0x60] sm:$0xff] %vm90, %v156
    %206 = vst.msk [vmem:[%s192 + $0x68] sm:$0xff] %vm90, %v157
    %207 = vst.msk [vmem:[%s192 + $0x70] sm:$0xff] %vm90, %v158
    %208 = vst.msk [vmem:[%s192 + $0x78] sm:$0xff] %vm90, %v159
    %209 = vst.msk [vmem:[%s192 + $0x80] sm:$0xff] %vm90, %v176
    %210 = vst.msk [vmem:[%s192 + $0x88] sm:$0xff] %vm90, %v177
    %211 = vst.msk [vmem:[%s192 + $0x90] sm:$0xff] %vm90, %v178
    %212 = vst.msk [vmem:[%s192 + $0x98] sm:$0xff] %vm90, %v179
    %213 = vst.msk [vmem:[%s192 + $0xa0] sm:$0xff] %vm90, %v180
    %214 = vst.msk [vmem:[%s192 + $0xa8] sm:$0xff] %vm90, %v181
    %215 = vst.msk [vmem:[%s192 + $0xb0] sm:$0xff] %vm90, %v182
    %216 = vst.msk [vmem:[%s192 + $0xb8] sm:$0xff] %vm90, %v183
    %217 = vst.msk [vmem:[%s192 + $0xc0] sm:$0xff] %vm90, %v184
    %218 = vst.msk [vmem:[%s192 + $0xc8] sm:$0xff] %vm90, %v185
    %219 = vst.msk [vmem:[%s192 + $0xd0] sm:$0xff] %vm90, %v186
    %220 = vst.msk [vmem:[%s192 + $0xd8] sm:$0xff] %vm90, %v187
    %221 = vst.msk [vmem:[%s192 + $0xe0] sm:$0xff] %vm90, %v188
    %222 = vst.msk [vmem:[%s192 + $0xe8] sm:$0xff] %vm90, %v189
    %223 = vst.msk [vmem:[%s192 + $0xf0] sm:$0xff] %vm90, %v190
    %224 = vst.msk [vmem:[%s192 + $0xf8] sm:$0xff] %vm90, %v191
    // Predicated region
    $region10: #{tpu_custom_call.1} parent=1 // pred_check
      _
    $region11: #{tpu_custom_call.1} parent=1 // pred_check_branch
      %226 = sbr.rel (0) target = $region13
    $region12: #{tpu_custom_call.1} parent=1 // pred_region
      _
    $region13: #{tpu_custom_call.1} parent=1 // pred_fallthru
      _
    // Predicated region
    $region14: #{tpu_custom_call.1} parent=1 // pred_check
      _
    $region15: #{tpu_custom_call.1} parent=1 // pred_check_branch
      %228 = sbr.rel (0) target = $region17
    $region16: #{tpu_custom_call.1} parent=1 // pred_region
      _
    $region17: #{tpu_custom_call.1} parent=1 // pred_fallthru
      _
    %229 = vsyncpa [#allocation3], 1

</llo_original>
